<compile_context>
chip_gen: v6e
topology: v6e:2x2x1
jax: 0.10.0
libtpu: 0.0.40
codegen_flags: <defaults>
</compile_context>

<pallas_src>
import functools
import math

import jax
import jax.numpy as jnp
from jax.experimental import pallas as pl
from jax.experimental.pallas import tpu as pltpu


_LANE = 128
_DEFAULT_VMEM_LIMIT = 48 * 1024 * 1024
_NEG_LARGE = -1e30


def _round_up(v, m):
    return ((v + m - 1) // m) * m


def _vmem_limit_bytes():
    """Generation-aware scoped-VMEM limit (v7x has 64 MiB/TC, v5e/v6e 128 MiB)."""
    try:
        cap = pltpu.get_tpu_info().vmem_capacity_bytes
        return int(min(max(int(0.8 * cap), 32 * 1024 * 1024), 110 * 1024 * 1024))
    except Exception:
        return _DEFAULT_VMEM_LIMIT


# ---------------------------------------------------------------------------
# Fully-fused kernel: the entire 10-layer network in one pallas_call.
# Grid axis = layer index; h and the running skip sum live in VMEM scratch.
# ---------------------------------------------------------------------------

def _fused_kernel(nclass, x_ref, adj_ref, w_ref, b_ref, out_ref, h_ref, skip_ref):
    l = pl.program_id(0)
    last = pl.num_programs(0) - 1

    @pl.when(l == 0)
    def _():
        h_ref[...] = x_ref[...]
        skip_ref[...] = jnp.zeros_like(skip_ref)

    # gcn_l(h) = adj @ (h @ W_l) + b_l, with relu.
    s = jnp.dot(h_ref[...], w_ref[0], preferred_element_type=jnp.float32)
    z = jnp.dot(adj_ref[...], s, preferred_element_type=jnp.float32) + b_ref[0]
    z = jnp.maximum(z, 0.0)

    @pl.when(l < last)
    def _():
        skip_prev = skip_ref[...]
        new_h = z + skip_prev            # x_{l+1} = relu(gcn) + sum_{i<=l} x_i
        h_ref[...] = new_h
        skip_ref[...] = skip_prev + new_h

    @pl.when(l == last)
    def _():
        # Final layer: log_softmax over the real class columns only
        # (padded lanes are excluded from the normalizer).
        col = jax.lax.broadcasted_iota(jnp.int32, z.shape, 1)
        logits = jnp.where(col < nclass, z, _NEG_LARGE)
        m = jnp.max(logits, axis=-1, keepdims=True)
        sh = logits - m
        lse = jnp.log(jnp.sum(jnp.exp(sh), axis=-1, keepdims=True))
        out = sh - lse
        out_ref[...] = jnp.where(col < nclass, out, 0.0).astype(out_ref.dtype)


def _fused_forward(x_p, adj, w_stack, b_stack, nclass, vmem_limit):
    n, fpad = x_p.shape
    nlayers = w_stack.shape[0]
    return pl.pallas_call(
        functools.partial(_fused_kernel, nclass),
        out_shape=jax.ShapeDtypeStruct((n, fpad), jnp.float32),
        grid_spec=pltpu.PrefetchScalarGridSpec(
            num_scalar_prefetch=0,
            grid=(nlayers,),
            in_specs=[
                pl.BlockSpec((n, fpad), lambda l: (0, 0)),           # x (resident)
                pl.BlockSpec((n, n), lambda l: (0, 0)),              # adj (resident)
                pl.BlockSpec((1, fpad, fpad), lambda l: (l, 0, 0)),  # W_l (streamed)
                pl.BlockSpec((1, 1, fpad), lambda l: (l, 0, 0)),     # b_l
            ],
            out_specs=pl.BlockSpec((n, fpad), lambda l: (0, 0)),
            scratch_shapes=[
                pltpu.VMEM((n, fpad), jnp.float32),   # h carry
                pltpu.VMEM((n, fpad), jnp.float32),   # running dense-skip sum
            ],
        ),
        compiler_params=pltpu.CompilerParams(
            dimension_semantics=("arbitrary",),
            vmem_limit_bytes=vmem_limit,
        ),
    )(x_p, adj, w_stack, b_stack)


def _fused_fits(n, fpad, vmem_limit):
    # Conservative: count adj / x / out as double-buffered.
    need = (
        2 * n * n * 4            # adj
        + 2 * n * fpad * 4       # x
        + 2 * n * fpad * 4       # out
        + 2 * n * fpad * 4       # h + skip scratch
        + 2 * fpad * fpad * 4    # W double buffer
        + 2 * fpad * 4           # bias
    )
    return need <= int(0.7 * vmem_limit)


# ---------------------------------------------------------------------------
# Per-layer fallback for large N: row-tiled, H@W fused into the aggregation
# kernel via associativity: (adj_tile @ H) @ W.
# ---------------------------------------------------------------------------

def _tiled_skip_kernel(adj_ref, h_ref, w_ref, b_ref, skip_ref, out_ref, skip_out_ref):
    ah = jnp.dot(adj_ref[...], h_ref[...], preferred_element_type=jnp.float32)
    z = jnp.dot(ah, w_ref[...], preferred_element_type=jnp.float32) + b_ref[...]
    z = jnp.maximum(z, 0.0)
    skip = skip_ref[...]
    out = z + skip
    out_ref[...] = out.astype(out_ref.dtype)
    skip_out_ref[...] = (skip + out).astype(skip_out_ref.dtype)


def _tiled_last_kernel(nclass, adj_ref, h_ref, w_ref, b_ref, out_ref):
    ah = jnp.dot(adj_ref[...], h_ref[...], preferred_element_type=jnp.float32)
    z = jnp.dot(ah, w_ref[...], preferred_element_type=jnp.float32) + b_ref[...]
    z = jnp.maximum(z, 0.0)
    col = jax.lax.broadcasted_iota(jnp.int32, z.shape, 1)
    logits = jnp.where(col < nclass, z, _NEG_LARGE)
    m = jnp.max(logits, axis=-1, keepdims=True)
    sh = logits - m
    lse = jnp.log(jnp.sum(jnp.exp(sh), axis=-1, keepdims=True))
    out = sh - lse
    out_ref[...] = jnp.where(col < nclass, out, 0.0).astype(out_ref.dtype)


def _pick_block_n(n, fpad, vmem_limit):
    """Largest sublane-aligned row tile dividing n that fits the VMEM budget."""
    budget = int(0.7 * vmem_limit)
    resident = 2 * n * fpad * 4 + 2 * fpad * fpad * 4 + 2 * fpad * 4  # H, W, bias
    per_row = 2 * 4 * (n + 4 * fpad)  # adj row tile + skip_in + 2 outputs (dbl buf)
    bn = (budget - resident) // per_row
    bn = max(8, min(n, int(bn)))
    bn = (bn // 8) * 8
    while bn > 8 and n % bn != 0:
        bn -= 8
    if bn < 8 or n % bn != 0:
        bn = n
    return bn


def _tiled_forward(x_p, adj, w_list, b_list, nclass, vmem_limit, block_n):
    n, fpad = x_p.shape
    assert n % block_n == 0
    grid = (n // block_n,)
    cp = pltpu.CompilerParams(
        dimension_semantics=("parallel",), vmem_limit_bytes=vmem_limit)

    # TODO(synk): for very large N on v7x (64 MiB VMEM) add a second grid axis
    # over adj columns with an f32 accumulator instead of a resident full H.
    h = x_p
    skip = jnp.zeros((n, fpad), jnp.float32)
    for k in range(len(w_list) - 1):
        h, skip = pl.pallas_call(
            _tiled_skip_kernel,
            out_shape=(jax.ShapeDtypeStruct((n, fpad), jnp.float32),
                       jax.ShapeDtypeStruct((n, fpad), jnp.float32)),
            grid_spec=pltpu.PrefetchScalarGridSpec(
                num_scalar_prefetch=0,
                grid=grid,
                in_specs=[
                    pl.BlockSpec((block_n, n), lambda i: (i, 0)),     # adj rows
                    pl.BlockSpec((n, fpad), lambda i: (0, 0)),        # full H
                    pl.BlockSpec((fpad, fpad), lambda i: (0, 0)),     # W_k
                    pl.BlockSpec((1, fpad), lambda i: (0, 0)),        # bias
                    pl.BlockSpec((block_n, fpad), lambda i: (i, 0)),  # skip rows
                ],
                out_specs=(pl.BlockSpec((block_n, fpad), lambda i: (i, 0)),
                           pl.BlockSpec((block_n, fpad), lambda i: (i, 0))),
            ),
            compiler_params=cp,
        )(adj, h, w_list[k], b_list[k], skip)

    return pl.pallas_call(
        functools.partial(_tiled_last_kernel, nclass),
        out_shape=jax.ShapeDtypeStruct((n, fpad), jnp.float32),
        grid_spec=pltpu.PrefetchScalarGridSpec(
            num_scalar_prefetch=0,
            grid=grid,
            in_specs=[
                pl.BlockSpec((block_n, n), lambda i: (i, 0)),
                pl.BlockSpec((n, fpad), lambda i: (0, 0)),
                pl.BlockSpec((fpad, fpad), lambda i: (0, 0)),
                pl.BlockSpec((1, fpad), lambda i: (0, 0)),
            ],
            out_specs=pl.BlockSpec((block_n, fpad), lambda i: (i, 0)),
        ),
        compiler_params=cp,
    )(adj, h, w_list[-1], b_list[-1])


# ---------------------------------------------------------------------------
# Driver
# ---------------------------------------------------------------------------

def dense_gcn_forward(x, adj, weights, biases, *, force_tiled=False, block_n=None):
    """DenseGCN inference forward pass.

    x: [N, nfeat], adj: [N, N] dense (normalized) adjacency,
    weights/biases: 10 GraphConvolution layers (pygcn convention).
    """
    # TODO(synk): training-mode dropout (Bernoulli mask + 1/(1-p) scaling) is
    # not implemented; eval-mode dropout is the identity, matching inference.
    n = x.shape[0]
    nclass = weights[-1].shape[1]
    fdims = [x.shape[1]] + [w.shape[0] for w in weights] + [w.shape[1] for w in weights]
    fpad = _round_up(max(fdims), _LANE)
    vmem_limit = _vmem_limit_bytes()

    def pad2(a):
        return jnp.pad(a.astype(jnp.float32),
                       ((0, fpad - a.shape[0]), (0, fpad - a.shape[1])))

    x_p = jnp.pad(x.astype(jnp.float32), ((0, 0), (0, fpad - x.shape[1])))
    adj = adj.astype(jnp.float32)
    w_list = [pad2(w) for w in weights]
    b_list = [jnp.pad(b.astype(jnp.float32), (0, fpad - b.shape[0])).reshape(1, fpad)
              for b in biases]

    if not force_tiled and _fused_fits(n, fpad, vmem_limit):
        w_stack = jnp.stack(w_list)                 # [L, fpad, fpad]
        b_stack = jnp.stack(b_list)                 # [L, 1, fpad]
        out_p = _fused_forward(x_p, adj, w_stack, b_stack, nclass, vmem_limit)
    else:
        bn = block_n if block_n is not None else _pick_block_n(n, fpad, vmem_limit)
        out_p = _tiled_forward(x_p, adj, w_list, b_list, nclass, vmem_limit, bn)

    return out_p[:, :nclass]


# ---------------------------------------------------------------------------
# Pure-JAX reference
# ---------------------------------------------------------------------------

def dense_gcn_reference(x, adj, weights, biases):
    hp = jax.lax.Precision.HIGHEST

    def gcn(h, w, b):
        return jnp.dot(adj, jnp.dot(h, w, precision=hp), precision=hp) + b

    xs = [jax.nn.relu(gcn(x, weights[0], biases[0]))]            # x1
    h = xs[0]
    for layer in range(1, 9):                                    # x2 .. x9
        h = jax.nn.relu(gcn(h, weights[layer], biases[layer])) + sum(xs)
        xs.append(h)
    logits = jax.nn.relu(gcn(h, weights[9], biases[9]))          # x10
    return jax.nn.log_softmax(logits, axis=1)


# ---------------------------------------------------------------------------
# Main
# ---------------------------------------------------------------------------

if __name__ == "__main__":
    N, nfeat, nhid, nclass = 128, 32, 32, 16

    key = jax.random.PRNGKey(0)
    ka, kx, kp = jax.random.split(key, 3)

    # Deterministic row-normalized dense adjacency with self loops.
    a = (jax.random.uniform(ka, (N, N)) < 0.05).astype(jnp.float32)
    a = jnp.clip(a + a.T + jnp.eye(N, dtype=jnp.float32), 0.0, 1.0)
    adj = a / jnp.sum(a, axis=1, keepdims=True)

    # Node features.
    x = jax.random.normal(kx, (N, nfeat), dtype=jnp.float32)

    # 10 GraphConvolution layers, pygcn-style uniform init.
    dims = [(nfeat, nhid)] + [(nhid, nhid)] * 8 + [(nhid, nclass)]
    weights, biases = [], []
    for fin, fout in dims:
        kp, kw, kb = jax.random.split(kp, 3)
        stdv = 1.0 / math.sqrt(fout)
        weights.append(jax.random.uniform(
            kw, (fin, fout), minval=-stdv, maxval=stdv, dtype=jnp.float32))
        biases.append(jax.random.uniform(
            kb, (fout,), minval=-stdv, maxval=stdv, dtype=jnp.float32))

    fwd = jax.jit(dense_gcn_forward, static_argnames=("force_tiled", "block_n"))

    ref = dense_gcn_reference(x, adj, weights, biases)

    # Fully-fused single-pallas_call path (chosen automatically at this size).
    out = fwd(x, adj, weights, biases)
    jax.block_until_ready(out)
    assert out.shape == (N, nclass)
    assert bool(jnp.all(jnp.isfinite(out))), "non-finite output (fused)"
    assert jnp.allclose(out, ref, atol=2e-3, rtol=2e-3), "mismatch (fused)"

    # Row-tiled per-layer fallback path (exercised explicitly for coverage).
    out_tiled = fwd(x, adj, weights, biases, force_tiled=True, block_n=64)
    jax.block_until_ready(out_tiled)
    assert out_tiled.shape == (N, nclass)
    assert bool(jnp.all(jnp.isfinite(out_tiled))), "non-finite output (tiled)"
    assert jnp.allclose(out_tiled, ref, atol=2e-3, rtol=2e-3), "mismatch (tiled)"

    print("KERNEL_OK")
</pallas_src>

<mosaic_0001>
module attributes {stable_mosaic.version = 11 : i64} {
  func.func @_fused_kernel(%arg0: i32, %arg1: memref<128x128xf32, #tpu.memory_space<vmem>>, %arg2: memref<128x128xf32, #tpu.memory_space<vmem>>, %arg3: memref<1x128x128xf32, #tpu.memory_space<vmem>>, %arg4: memref<1x1x128xf32, #tpu.memory_space<vmem>>, %arg5: memref<128x128xf32, #tpu.memory_space<vmem>>, %arg6: memref<128x128xf32, #tpu.memory_space<vmem>>, %arg7: memref<128x128xf32, #tpu.memory_space<vmem>>) attributes {dimension_semantics = [#tpu.dimension_semantics<arbitrary>], iteration_bounds = array<i64: 10>, scalar_prefetch = 0 : i64, scratch_operands = 2 : i64, tpu.core_type = #tpu.core_type<tc>, window_params = [{pipeline_mode = #tpu.pipeline_mode<synchronous>, transform_indices = @transform_0, window_bounds = array<i64: 128, 128>}, {pipeline_mode = #tpu.pipeline_mode<synchronous>, transform_indices = @transform_1, window_bounds = array<i64: 128, 128>}, {transform_indices = @transform_2, window_bounds = array<i64: 1, 128, 128>}, {transform_indices = @transform_3, window_bounds = array<i64: 1, 1, 128>}, {pipeline_mode = #tpu.pipeline_mode<synchronous>, transform_indices = @transform_4, window_bounds = array<i64: 128, 128>}]} {
    %c0_i32 = arith.constant 0 : i32
    %0 = arith.cmpi eq, %arg0, %c0_i32 : i32
    %1 = arith.extui %0 : i1 to i32
    %c0_i32_0 = arith.constant 0 : i32
    %2 = arith.cmpi ne, %1, %c0_i32_0 : i32
    scf.if %2 {
      %c0_15 = arith.constant 0 : index
      %c0_16 = arith.constant 0 : index
      %21 = vector.load %arg1[%c0_15, %c0_16] : memref<128x128xf32, #tpu.memory_space<vmem>>, vector<128x128xf32>
      %c0_17 = arith.constant 0 : index
      %c0_18 = arith.constant 0 : index
      %22 = vector.load %arg6[%c0_17, %c0_18] : memref<128x128xf32, #tpu.memory_space<vmem>>, vector<128x128xf32>
      tpu.vector_store %arg6[%c0_17, %c0_18], %21 {strides = array<i32>} : memref<128x128xf32, #tpu.memory_space<vmem>>, vector<128x128xf32>,
      %cst_19 = arith.constant 0.000000e+00 : f32
      %23 = vector.broadcast %cst_19 : f32 to vector<128x128xf32>
      %c0_20 = arith.constant 0 : index
      %c0_21 = arith.constant 0 : index
      %24 = vector.load %arg7[%c0_20, %c0_21] : memref<128x128xf32, #tpu.memory_space<vmem>>, vector<128x128xf32>
      tpu.vector_store %arg7[%c0_20, %c0_21], %23 {strides = array<i32>} : memref<128x128xf32, #tpu.memory_space<vmem>>, vector<128x128xf32>,
    } else {
    }
    %c0 = arith.constant 0 : index
    %c0_1 = arith.constant 0 : index
    %3 = vector.load %arg6[%c0, %c0_1] : memref<128x128xf32, #tpu.memory_space<vmem>>, vector<128x128xf32>
    %c0_2 = arith.constant 0 : index
    %c0_3 = arith.constant 0 : index
    %c0_4 = arith.constant 0 : index
    %4 = vector.load %arg3[%c0_2, %c0_3, %c0_4] : memref<1x128x128xf32, #tpu.memory_space<vmem>>, vector<1x128x128xf32>
    %5 = vector.shape_cast %4 : vector<1x128x128xf32> to vector<128x128xf32>
    %cst = arith.constant dense<0.000000e+00> : vector<128x128xf32>
    %6 = tpu.matmul %3, %5, %cst {dimension_numbers = #tpu.dot_dimension_numbers<[1], [0], [0], [1], [0, 0, 1, 1], [], []>} : vector<128x128xf32>, vector<128x128xf32>, vector<128x128xf32> -> vector<128x128xf32>
    %c0_5 = arith.constant 0 : index
    %c0_6 = arith.constant 0 : index
    %7 = vector.load %arg2[%c0_5, %c0_6] : memref<128x128xf32, #tpu.memory_space<vmem>>, vector<128x128xf32>
    %cst_7 = arith.constant dense<0.000000e+00> : vector<128x128xf32>
    %8 = tpu.matmul %7, %6, %cst_7 {dimension_numbers = #tpu.dot_dimension_numbers<[1], [0], [0], [1], [0, 0, 1, 1], [], []>} : vector<128x128xf32>, vector<128x128xf32>, vector<128x128xf32> -> vector<128x128xf32>
    %c0_8 = arith.constant 0 : index
    %c0_9 = arith.constant 0 : index
    %c0_10 = arith.constant 0 : index
    %9 = vector.load %arg4[%c0_8, %c0_9, %c0_10] : memref<1x1x128xf32, #tpu.memory_space<vmem>>, vector<1x1x128xf32>
    %10 = vector.shape_cast %9 : vector<1x1x128xf32> to vector<1x128xf32>
    %11 = vector.broadcast %10 : vector<1x128xf32> to vector<128x128xf32>
    %12 = arith.addf %8, %11 : vector<128x128xf32>
    %cst_11 = arith.constant 0.000000e+00 : f32
    %13 = vector.broadcast %cst_11 : f32 to vector<128x128xf32>
    %14 = arith.maximumf %12, %13 : vector<128x128xf32>
    %c9_i32 = arith.constant 9 : i32
    %15 = arith.cmpi slt, %arg0, %c9_i32 : i32
    %16 = arith.extui %15 : i1 to i32
    %c0_i32_12 = arith.constant 0 : i32
    %17 = arith.cmpi ne, %16, %c0_i32_12 : i32
    scf.if %17 {
      %c0_15 = arith.constant 0 : index
      %c0_16 = arith.constant 0 : index
      %21 = vector.load %arg7[%c0_15, %c0_16] : memref<128x128xf32, #tpu.memory_space<vmem>>, vector<128x128xf32>
      %22 = arith.addf %14, %21 : vector<128x128xf32>
      %c0_17 = arith.constant 0 : index
      %c0_18 = arith.constant 0 : index
      %23 = vector.load %arg6[%c0_17, %c0_18] : memref<128x128xf32, #tpu.memory_space<vmem>>, vector<128x128xf32>
      tpu.vector_store %arg6[%c0_17, %c0_18], %22 {strides = array<i32>} : memref<128x128xf32, #tpu.memory_space<vmem>>, vector<128x128xf32>,
      %24 = arith.addf %21, %22 : vector<128x128xf32>
      %c0_19 = arith.constant 0 : index
      %c0_20 = arith.constant 0 : index
      %25 = vector.load %arg7[%c0_19, %c0_20] : memref<128x128xf32, #tpu.memory_space<vmem>>, vector<128x128xf32>
      tpu.vector_store %arg7[%c0_19, %c0_20], %24 {strides = array<i32>} : memref<128x128xf32, #tpu.memory_space<vmem>>, vector<128x128xf32>,
    } else {
    }
    %c9_i32_13 = arith.constant 9 : i32
    %18 = arith.cmpi eq, %arg0, %c9_i32_13 : i32
    %19 = arith.extui %18 : i1 to i32
    %c0_i32_14 = arith.constant 0 : i32
    %20 = arith.cmpi ne, %19, %c0_i32_14 : i32
    scf.if %20 {
      %21 = tpu.iota {dimensions = array<i32: 1>} : vector<128x128xi32>
      %c16_i32 = arith.constant 16 : i32
      %22 = vector.broadcast %c16_i32 : i32 to vector<128x128xi32>
      %23 = arith.cmpi slt, %21, %22 : vector<128x128xi32>
      %cst_15 = arith.constant -1.000000e+30 : f32
      %24 = vector.broadcast %cst_15 : f32 to vector<128x128xf32>
      %25 = arith.select %23, %14, %24 : vector<128x128xi1>, vector<128x128xf32>
      %cst_16 = arith.constant dense<0xFF800000> : vector<128xf32>
      %26 = vector.multi_reduction <maximumf>, %25, %cst_16 [1] : vector<128x128xf32> to vector<128xf32>
      %27 = vector.shape_cast %26 : vector<128xf32> to vector<128x1xf32>
      %28 = vector.broadcast %27 : vector<128x1xf32> to vector<128x128xf32>
      %29 = arith.subf %25, %28 : vector<128x128xf32>
      %30 = math.exp %29 : vector<128x128xf32>
      %cst_17 = arith.constant dense<0.000000e+00> : vector<128xf32>
      %31 = vector.multi_reduction <add>, %30, %cst_17 [1] : vector<128x128xf32> to vector<128xf32>
      %32 = vector.shape_cast %31 : vector<128xf32> to vector<128x1xf32>
      %33 = math.log %32 : vector<128x1xf32>
      %34 = vector.broadcast %33 : vector<128x1xf32> to vector<128x128xf32>
      %35 = arith.subf %29, %34 : vector<128x128xf32>
      %c16_i32_18 = arith.constant 16 : i32
      %36 = vector.broadcast %c16_i32_18 : i32 to vector<128x128xi32>
      %37 = arith.cmpi slt, %21, %36 : vector<128x128xi32>
      %cst_19 = arith.constant 0.000000e+00 : f32
      %38 = vector.broadcast %cst_19 : f32 to vector<128x128xf32>
      %39 = arith.select %37, %35, %38 : vector<128x128xi1>, vector<128x128xf32>
      %c0_20 = arith.constant 0 : index
      %c0_21 = arith.constant 0 : index
      %40 = vector.load %arg5[%c0_20, %c0_21] : memref<128x128xf32, #tpu.memory_space<vmem>>, vector<128x128xf32>
      tpu.vector_store %arg5[%c0_20, %c0_21], %39 {strides = array<i32>} : memref<128x128xf32, #tpu.memory_space<vmem>>, vector<128x128xf32>,
    } else {
    }
    return
  }
  func.func @transform_0(%arg0: i32) -> (i32, i32) {
    %c0_i32 = arith.constant 0 : i32
    %c0_i32_0 = arith.constant 0 : i32
    %c0_i32_1 = arith.constant 0 : i32
    return %c0_i32, %c0_i32_0 : i32, i32
  }
  func.func @transform_1(%arg0: i32) -> (i32, i32) {
    %c0_i32 = arith.constant 0 : i32
    %c0_i32_0 = arith.constant 0 : i32
    %c0_i32_1 = arith.constant 0 : i32
    return %c0_i32, %c0_i32_0 : i32, i32
  }
  func.func @transform_2(%arg0: i32) -> (i32, i32, i32) {
    %c0_i32 = arith.constant 0 : i32
    %c0_i32_0 = arith.constant 0 : i32
    %c0_i32_1 = arith.constant 0 : i32
    return %arg0, %c0_i32, %c0_i32_0 : i32, i32, i32
  }
  func.func @transform_3(%arg0: i32) -> (i32, i32, i32) {
    %c0_i32 = arith.constant 0 : i32
    %c0_i32_0 = arith.constant 0 : i32
    %c0_i32_1 = arith.constant 0 : i32
    return %arg0, %c0_i32, %c0_i32_0 : i32, i32, i32
  }
  func.func @transform_4(%arg0: i32) -> (i32, i32) {
    %c0_i32 = arith.constant 0 : i32
    %c0_i32_0 = arith.constant 0 : i32
    %c0_i32_1 = arith.constant 0 : i32
    return %c0_i32, %c0_i32_0 : i32, i32
  }
}

</mosaic_0001>

<llo_original>
// kernel: dense_gcn_forward.1
$region0: #{dense_gcn_forward.1}
  #allocation0 [shape = 'u32[]', space=smem, size = 0x4, offset = 0x4, fixed_abs, tag = 'smem constant byte address 0x4 - core index']
  #allocation1 [shape = 'u32[144,128]{1,0:T(1,128)}', space=vmem, size = 0x12000, scoped, tag = 'internal scratch']
  #allocation2 [shape = 'f32[128,128]{1,0:T(8,128)}', space=vmem, size = 0x10000, scoped, tag = 'scratch operand']
  #allocation3 [shape = 'f32[128,128]{1,0:T(8,128)}', space=vmem, size = 0x10000, scoped, tag = 'scratch operand']
  %s0 = inlined_call_operand.vmem [shape: f32[128,128], index: 0, kind: input, shape index: {}]
  %s1 = inlined_call_operand.vmem [shape: f32[128,128], index: 1, kind: input, shape index: {}]
  %s2 = inlined_call_operand.vmem [shape: f32[10,128,128], index: 2, kind: input, shape index: {}]
  %s3 = inlined_call_operand.vmem [shape: f32[10,1,128], index: 3, kind: input, shape index: {}]
  %s4 = inlined_call_operand.vmem [shape: f32[128,128], index: 4, kind: output, shape index: {}]
  %s5 = sld [smem:[#allocation0]]
  $region61: #{dense_gcn_forward.1} parent=0
    _
  %s7 = ssub.s32 1, %s5
  %s8 = scalar_select 0, %s7, %s5
  loop: start=0, step=1, limit=12
  $region2: #{dense_gcn_forward.1} parent=0 // loop_pre_header
    _
  $region3: #{dense_gcn_forward.1} parent=0 // loop_header
    %s10 = sphi 0, %s14
    %p11 = scmp.ge.s32.totalorder %s10, 12
    %s18 = sphi 0, %s18
    %s20 = sphi 0, %s18
    %s21 = sphi 0, %s20
    %s35 = sphi 0, %s21
    %s39 = sphi 0, %s39
    %s41 = sphi 0, %s39
    %s42 = sphi 0, %s41
    %s56 = sphi 0, %s42
    %s62 = sphi 0, %s64
    %s65 = sphi 0, %s62
    %s66 = sphi 0, %s65
    %s82 = sphi 0, %s66
    %s88 = sphi 0, %s90
    %s91 = sphi 0, %s88
    %s92 = sphi 0, %s91
    %s108 = sphi 0, %s92
    %s112 = sphi 0, %s112
    %s114 = sphi 0, %s112
    %s115 = sphi 0, %s114
    %s129 = sphi 0, %s115
  $region4: #{dense_gcn_forward.1} parent=0 // loop_header_branch
    %13 = sbr.rel (%p11) target = $region8
  $region5: #{dense_gcn_forward.1} parent=0 // loop_body
    %s15 = ssub.s32 %s10, 1
    %s16 = ssub.s32 %s10, 2
    %s17 = sadd.s32 %s10, 1
    %s19 = sadd.s32 %s18, 1
    %p22 = scmp.eq.s32.totalorder %s10, 9
    %p23 = scmp.ne.s32.totalorder %s18, %s20
    %p24 = scmp.eq.s32.totalorder %s10, 0
    %p25 = por %p23, %p24
    %p26 = scmp.ne.s32.totalorder %s18, %s20
    %p27 = scmp.eq.s32.totalorder %s15, 9
    %p28 = por %p26, %p27
    %p29 = scmp.ne.s32.totalorder %s20, %s21
    %p30 = scmp.eq.s32.totalorder %s15, 0
    %p31 = por %p29, %p30
    %p32 = scmp.ne.s32.totalorder %s20, %s21
    %p33 = scmp.eq.s32.totalorder %s16, 9
    %p34 = por %p32, %p33
    %p36 = scmp.ne.s32.totalorder %s21, %s35
    %p37 = scmp.eq.s32.totalorder %s16, 0
    %p38 = por %p36, %p37
    %s40 = sadd.s32 %s39, 1
    %p43 = scmp.eq.s32.totalorder %s10, 9
    %p44 = scmp.ne.s32.totalorder %s39, %s41
    %p45 = scmp.eq.s32.totalorder %s10, 0
    %p46 = por %p44, %p45
    %p47 = scmp.ne.s32.totalorder %s39, %s41
    %p48 = scmp.eq.s32.totalorder %s15, 9
    %p49 = por %p47, %p48
    %p50 = scmp.ne.s32.totalorder %s41, %s42
    %p51 = scmp.eq.s32.totalorder %s15, 0
    %p52 = por %p50, %p51
    %p53 = scmp.ne.s32.totalorder %s41, %s42
    %p54 = scmp.eq.s32.totalorder %s16, 9
    %p55 = por %p53, %p54
    %p57 = scmp.ne.s32.totalorder %s42, %s56
    %p58 = scmp.eq.s32.totalorder %s16, 0
    %p59 = por %p57, %p58
    %s60 = ssub.s32 %s10, %s17
    %p61 = scmp.eq.s32.totalorder %s60, 0
    %s63 = sadd.s32 %s62, 1
    %s64 = scalar_select %p61, %s62, %s63
    %p67 = pneg %p61
    %p68 = scmp.eq.s32.totalorder %s10, 9
    %p69 = por %p67, %p68
    %p70 = scmp.ne.s32.totalorder %s62, %s65
    %p71 = scmp.eq.s32.totalorder %s10, 0
    %p72 = por %p70, %p71
    %p73 = scmp.ne.s32.totalorder %s62, %s65
    %p74 = scmp.eq.s32.totalorder %s15, 9
    %p75 = por %p73, %p74
    %p76 = scmp.ne.s32.totalorder %s65, %s66
    %p77 = scmp.eq.s32.totalorder %s15, 0
    %p78 = por %p76, %p77
    %p79 = scmp.ne.s32.totalorder %s65, %s66
    %p80 = scmp.eq.s32.totalorder %s16, 9
    %p81 = por %p79, %p80
    %p83 = scmp.ne.s32.totalorder %s66, %s82
    %p84 = scmp.eq.s32.totalorder %s16, 0
    %p85 = por %p83, %p84
    %s86 = ssub.s32 %s10, %s17
    %p87 = scmp.eq.s32.totalorder %s86, 0
    %s89 = sadd.s32 %s88, 1
    %s90 = scalar_select %p87, %s88, %s89
    %p93 = pneg %p87
    %p94 = scmp.eq.s32.totalorder %s10, 9
    %p95 = por %p93, %p94
    %p96 = scmp.ne.s32.totalorder %s88, %s91
    %p97 = scmp.eq.s32.totalorder %s10, 0
    %p98 = por %p96, %p97
    %p99 = scmp.ne.s32.totalorder %s88, %s91
    %p100 = scmp.eq.s32.totalorder %s15, 9
    %p101 = por %p99, %p100
    %p102 = scmp.ne.s32.totalorder %s91, %s92
    %p103 = scmp.eq.s32.totalorder %s15, 0
    %p104 = por %p102, %p103
    %p105 = scmp.ne.s32.totalorder %s91, %s92
    %p106 = scmp.eq.s32.totalorder %s16, 9
    %p107 = por %p105, %p106
    %p109 = scmp.ne.s32.totalorder %s92, %s108
    %p110 = scmp.eq.s32.totalorder %s16, 0
    %p111 = por %p109, %p110
    %s113 = sadd.s32 %s112, 1
    %p116 = scmp.eq.s32.totalorder %s10, 9
    %p117 = scmp.ne.s32.totalorder %s112, %s114
    %p118 = scmp.eq.s32.totalorder %s10, 0
    %p119 = por %p117, %p118
    %p120 = scmp.ne.s32.totalorder %s112, %s114
    %p121 = scmp.eq.s32.totalorder %s15, 9
    %p122 = por %p120, %p121
    %p123 = scmp.ne.s32.totalorder %s114, %s115
    %p124 = scmp.eq.s32.totalorder %s15, 0
    %p125 = por %p123, %p124
    %p126 = scmp.ne.s32.totalorder %s114, %s115
    %p127 = scmp.eq.s32.totalorder %s16, 9
    %p128 = por %p126, %p127
    %p130 = scmp.ne.s32.totalorder %s115, %s129
    %p131 = scmp.eq.s32.totalorder %s16, 0
    %p132 = por %p130, %p131
    %p133 = scmp.le.s32.totalorder 1, %s10
    %p134 = scmp.lt.s32.totalorder %s10, 11
    %p135 = pnand %p133, %p134
    %p136 = pneg %p135
    // Predicated region
    $region9: #{dense_gcn_forward.1} parent=5 // pred_check
      _
    $region10: #{dense_gcn_forward.1} parent=5 // pred_check_branch
      %138 = sbr.rel (%p135) target = $region12
    $region11: #{dense_gcn_forward.1} parent=5 // pred_region
      %s139 = ssub.s32 %s10, 1
      // Predicated region
      $region13: #{dense_gcn_forward.1} parent=11 // pred_check
        %p140 = pneg %p31
      $region14: #{dense_gcn_forward.1} parent=11 // pred_check_branch
        %142 = sbr.rel (%p140) target = $region16
      $region15: #{dense_gcn_forward.1} parent=11 // pred_region
        _
      $region16: #{dense_gcn_forward.1} parent=11 // pred_fallthru
        _
      // Predicated region
      $region17: #{dense_gcn_forward.1} parent=11 // pred_check
        %p143 = pneg %p52
      $region18: #{dense_gcn_forward.1} parent=11 // pred_check_branch
        %145 = sbr.rel (%p143) target = $region20
      $region19: #{dense_gcn_forward.1} parent=11 // pred_region
        _
      $region20: #{dense_gcn_forward.1} parent=11 // pred_fallthru
        _
    $region12: #{dense_gcn_forward.1} parent=5 // pred_fallthru
      _
    %p146 = scmp.lt.s32.totalorder %s10, 10
    // Predicated region
    $region21: #{dense_gcn_forward.1} parent=5 // pred_check
      %p147 = pneg %p146
    $region22: #{dense_gcn_forward.1} parent=5 // pred_check_branch
      %149 = sbr.rel (%p147) target = $region24
    $region23: #{dense_gcn_forward.1} parent=5 // pred_region
      // Predicated region
      $region25: #{dense_gcn_forward.1} parent=23 // pred_check
        %p150 = pneg %p72
      $region26: #{dense_gcn_forward.1} parent=23 // pred_check_branch
        %152 = sbr.rel (%p150) target = $region28
      $region27: #{dense_gcn_forward.1} parent=23 // pred_region
        %p153 = scmp.lt.s32.totalorder %s10, 9
        %s154 = scalar_select %p153, %s10, 9
        %s155 = smul.addr %s154, 16
        %s156 = smul.addr %s155, 8
        %s157 = scalar_lea.vmem %s2, %s156
      $region28: #{dense_gcn_forward.1} parent=23 // pred_fallthru
        _
      // Predicated region
      $region29: #{dense_gcn_forward.1} parent=23 // pred_check
        %p158 = pneg %p98
      $region30: #{dense_gcn_forward.1} parent=23 // pred_check_branch
        %160 = sbr.rel (%p158) target = $region32
      $region31: #{dense_gcn_forward.1} parent=23 // pred_region
        %p161 = scmp.lt.s32.totalorder %s10, 9
        %s162 = scalar_select %p161, %s10, 9
        %s163 = scalar_lea.vmem %s3, %s162
      $region32: #{dense_gcn_forward.1} parent=23 // pred_fallthru
        _
    $region24: #{dense_gcn_forward.1} parent=5 // pred_fallthru
      _
    %p164 = scmp.le.s32.totalorder 1, %s10
    %p165 = scmp.lt.s32.totalorder %s10, 11
    %p166 = pnand %p164, %p165
    %p167 = pneg %p166
    // Predicated region
    $region33: #{dense_gcn_forward.1} parent=5 // pred_check
      _
    $region34: #{dense_gcn_forward.1} parent=5 // pred_check_branch
      %169 = sbr.rel (%p166) target = $region36
    $region35: #{dense_gcn_forward.1} parent=5 // pred_region
      %s170 = ssub.s32 %s10, 1
      %p171 = pneg %p31
      %p172 = pneg %p28
      %p173 = pneg %p52
      %p174 = pneg %p49
      %p175 = scmp.lt.s32.totalorder %s15, 9
      %s176 = scalar_select %p175, %s15, 9
      %s177 = smul.addr %s176, 16
      %s178 = smul.addr %s177, 8
      %s179 = scalar_lea.vmem %s2, %s178
      %p180 = pneg %p78
      %p181 = pneg %p75
      %p182 = scmp.lt.s32.totalorder %s15, 9
      %s183 = scalar_select %p182, %s15, 9
      %s184 = scalar_lea.vmem %s3, %s183
      %p185 = pneg %p104
      %p186 = pneg %p101
      %p187 = pneg %p125
      %p188 = pneg %p122
      %p189 = scmp.lt.s32.totalorder %s15, 9
      %s190 = scalar_select %p189, %s15, 9
      %s191 = smul.addr %s190, 16
      %s192 = smul.addr %s191, 8
      %s193 = scalar_lea.vmem %s2, %s192
      %p194 = scmp.lt.s32.totalorder %s15, 9
      %s195 = scalar_select %p194, %s15, 9
      %s196 = scalar_lea.vmem %s3, %s195
      %p197 = scmp.eq.s32.totalorder %s15, 0
      // Predicated region
      $region37: #{dense_gcn_forward.1} parent=35 // pred_check
        %p198 = pneg %p197
      $region38: #{dense_gcn_forward.1} parent=35 // pred_check_branch
        %200 = sbr.rel (%p198) target = $region40
      $region39: #{dense_gcn_forward.1} parent=35 // pred_region
        %v201 = vld [vmem:[%s0] sm:$0xff]
        %v202 = vld [vmem:[%s0 + $0x8] sm:$0xff]
        %v203 = vld [vmem:[%s0 + $0x10] sm:$0xff]
        %v204 = vld [vmem:[%s0 + $0x18] sm:$0xff]
        %v205 = vld [vmem:[%s0 + $0x20] sm:$0xff]
        %v206 = vld [vmem:[%s0 + $0x28] sm:$0xff]
        %v207 = vld [vmem:[%s0 + $0x30] sm:$0xff]
        %v208 = vld [vmem:[%s0 + $0x38] sm:$0xff]
        %v209 = vld [vmem:[%s0 + $0x40] sm:$0xff]
        %v210 = vld [vmem:[%s0 + $0x48] sm:$0xff]
        %v211 = vld [vmem:[%s0 + $0x50] sm:$0xff]
        %v212 = vld [vmem:[%s0 + $0x58] sm:$0xff]
        %v213 = vld [vmem:[%s0 + $0x60] sm:$0xff]
        %v214 = vld [vmem:[%s0 + $0x68] sm:$0xff]
        %v215 = vld [vmem:[%s0 + $0x70] sm:$0xff]
        %v216 = vld [vmem:[%s0 + $0x78] sm:$0xff]
        %217 = vst [vmem:[#allocation2] sm:$0xff] %v201
        %218 = vst [vmem:[#allocation2 + $0x8] sm:$0xff] %v202
        %219 = vst [vmem:[#allocation2 + $0x10] sm:$0xff] %v203
        %220 = vst [vmem:[#allocation2 + $0x18] sm:$0xff] %v204
        %221 = vst [vmem:[#allocation2 + $0x20] sm:$0xff] %v205
        %222 = vst [vmem:[#allocation2 + $0x28] sm:$0xff] %v206
        %223 = vst [vmem:[#allocation2 + $0x30] sm:$0xff] %v207
        %224 = vst [vmem:[#allocation2 + $0x38] sm:$0xff] %v208
        %225 = vst [vmem:[#allocation2 + $0x40] sm:$0xff] %v209
        %226 = vst [vmem:[#allocation2 + $0x48] sm:$0xff] %v210
        %227 = vst [vmem:[#allocation2 + $0x50] sm:$0xff] %v211
        %228 = vst [vmem:[#allocation2 + $0x58] sm:$0xff] %v212
        %229 = vst [vmem:[#allocation2 + $0x60] sm:$0xff] %v213
        %230 = vst [vmem:[#allocation2 + $0x68] sm:$0xff] %v214
        %231 = vst [vmem:[#allocation2 + $0x70] sm:$0xff] %v215
        %232 = vst [vmem:[#allocation2 + $0x78] sm:$0xff] %v216
        %233 = vst [vmem:[#allocation3] sm:$0xff] 0.0
        %234 = vst [vmem:[#allocation3 + $0x8] sm:$0xff] 0.0
        %235 = vst [vmem:[#allocation3 + $0x10] sm:$0xff] 0.0
        %236 = vst [vmem:[#allocation3 + $0x18] sm:$0xff] 0.0
        %237 = vst [vmem:[#allocation3 + $0x20] sm:$0xff] 0.0
        %238 = vst [vmem:[#allocation3 + $0x28] sm:$0xff] 0.0
        %239 = vst [vmem:[#allocation3 + $0x30] sm:$0xff] 0.0
        %240 = vst [vmem:[#allocation3 + $0x38] sm:$0xff] 0.0
        %241 = vst [vmem:[#allocation3 + $0x40] sm:$0xff] 0.0
        %242 = vst [vmem:[#allocation3 + $0x48] sm:$0xff] 0.0
        %243 = vst [vmem:[#allocation3 + $0x50] sm:$0xff] 0.0
        %244 = vst [vmem:[#allocation3 + $0x58] sm:$0xff] 0.0
        %245 = vst [vmem:[#allocation3 + $0x60] sm:$0xff] 0.0
        %246 = vst [vmem:[#allocation3 + $0x68] sm:$0xff] 0.0
        %247 = vst [vmem:[#allocation3 + $0x70] sm:$0xff] 0.0
        %248 = vst [vmem:[#allocation3 + $0x78] sm:$0xff] 0.0
      $region40: #{dense_gcn_forward.1} parent=35 // pred_fallthru
        _
      %v249 = vld [vmem:[#allocation2] sm:$0xff]
      %v250 = vld [vmem:[#allocation2 + $0x8] sm:$0xff]
      %v251 = vld [vmem:[#allocation2 + $0x10] sm:$0xff]
      %v252 = vld [vmem:[#allocation2 + $0x18] sm:$0xff]
      %v253 = vld [vmem:[#allocation2 + $0x20] sm:$0xff]
      %v254 = vld [vmem:[#allocation2 + $0x28] sm:$0xff]
      %v255 = vld [vmem:[#allocation2 + $0x30] sm:$0xff]
      %v256 = vld [vmem:[#allocation2 + $0x38] sm:$0xff]
      %v257 = vld [vmem:[#allocation2 + $0x40] sm:$0xff]
      %v258 = vld [vmem:[#allocation2 + $0x48] sm:$0xff]
      %v259 = vld [vmem:[#allocation2 + $0x50] sm:$0xff]
      %v260 = vld [vmem:[#allocation2 + $0x58] sm:$0xff]
      %v261 = vld [vmem:[#allocation2 + $0x60] sm:$0xff]
      %v262 = vld [vmem:[#allocation2 + $0x68] sm:$0xff]
      %v263 = vld [vmem:[#allocation2 + $0x70] sm:$0xff]
      %v264 = vld [vmem:[#allocation2 + $0x78] sm:$0xff]
      %v265 = vld [vmem:[%s193] sm:$0xff]
      %v266 = vld [vmem:[%s193 + $0x8] sm:$0xff]
      %v267 = vld [vmem:[%s193 + $0x10] sm:$0xff]
      %v268 = vld [vmem:[%s193 + $0x18] sm:$0xff]
      %v269 = vld [vmem:[%s193 + $0x20] sm:$0xff]
      %v270 = vld [vmem:[%s193 + $0x28] sm:$0xff]
      %v271 = vld [vmem:[%s193 + $0x30] sm:$0xff]
      %v272 = vld [vmem:[%s193 + $0x38] sm:$0xff]
      %v273 = vld [vmem:[%s193 + $0x40] sm:$0xff]
      %v274 = vld [vmem:[%s193 + $0x48] sm:$0xff]
      %v275 = vld [vmem:[%s193 + $0x50] sm:$0xff]
      %v276 = vld [vmem:[%s193 + $0x58] sm:$0xff]
      %v277 = vld [vmem:[%s193 + $0x60] sm:$0xff]
      %v278 = vld [vmem:[%s193 + $0x68] sm:$0xff]
      %v279 = vld [vmem:[%s193 + $0x70] sm:$0xff]
      %v280 = vld [vmem:[%s193 + $0x78] sm:$0xff]
      %281 = vmatprep.subr.mxu0 0.0
      %282 = vmatpush1.msra.mxu0 %v280
      %283 = vmatprep.subr.mxu0 0.0
      %284 = vmatpush1.msra.mxu0 %v279
      %285 = vmatprep.subr.mxu0 0.0
      %286 = vmatpush1.msra.mxu0 %v278
      %287 = vmatprep.subr.mxu0 0.0
      %288 = vmatpush1.msra.mxu0 %v277
      %289 = vmatprep.subr.mxu0 0.0
      %290 = vmatpush1.msra.mxu0 %v276
      %291 = vmatprep.subr.mxu0 0.0
      %292 = vmatpush1.msra.mxu0 %v275
      %293 = vmatprep.subr.mxu0 0.0
      %294 = vmatpush1.msra.mxu0 %v274
      %295 = vmatprep.subr.mxu0 0.0
      %296 = vmatpush1.msra.mxu0 %v273
      %297 = vmatprep.subr.mxu0 0.0
      %298 = vmatpush1.msra.mxu0 %v272
      %299 = vmatprep.subr.mxu0 0.0
      %300 = vmatpush1.msra.mxu0 %v271
      %301 = vmatprep.subr.mxu0 0.0
      %302 = vmatpush1.msra.mxu0 %v270
      %303 = vmatprep.subr.mxu0 0.0
      %304 = vmatpush1.msra.mxu0 %v269
      %305 = vmatprep.subr.mxu0 0.0
      %306 = vmatpush1.msra.mxu0 %v268
      %307 = vmatprep.subr.mxu0 0.0
      %308 = vmatpush1.msra.mxu0 %v267
      %309 = vmatprep.subr.mxu0 0.0
      %310 = vmatpush1.msra.mxu0 %v266
      %311 = vmatprep.subr.mxu0 0.0
      %312 = vmatpush1.msra.mxu0 %v265
      %313 = vmatprep.subr.mxu0 0.0
      %314 = vmatpush2.msra.mxu0 0.0
      %315 = vmatprep.subr.mxu0 0.0
      %316 = vmatpush2.msra.mxu0 0.0
      %317 = vmatprep.subr.mxu0 0.0
      %318 = vmatpush2.msra.mxu0 0.0
      %319 = vmatprep.subr.mxu0 0.0
      %320 = vmatpush2.msra.mxu0 0.0
      %321 = vmatprep.subr.mxu0 0.0
      %322 = vmatpush2.msra.mxu0 0.0
      %323 = vmatprep.subr.mxu0 0.0
      %324 = vmatpush2.msra.mxu0 0.0
      %325 = vmatprep.subr.mxu0 0.0
      %326 = vmatpush2.msra.mxu0 0.0
      %327 = vmatprep.subr.mxu0 0.0
      %328 = vmatpush2.msra.mxu0 0.0
      %329 = vmatprep.subr.mxu0 0.0
      %330 = vmatpush2.msra.mxu0 0.0
      %331 = vmatprep.subr.mxu0 0.0
      %332 = vmatpush2.msra.mxu0 0.0
      %333 = vmatprep.subr.mxu0 0.0
      %334 = vmatpush2.msra.mxu0 0.0
      %335 = vmatprep.subr.mxu0 0.0
      %336 = vmatpush2.msra.mxu0 0.0
      %337 = vmatprep.subr.mxu0 0.0
      %338 = vmatpush2.msra.mxu0 0.0
      %339 = vmatprep.subr.mxu0 0.0
      %340 = vmatpush2.msra.mxu0 0.0
      %341 = vmatprep.subr.mxu0 0.0
      %342 = vmatpush2.msra.mxu0 0.0
      %343 = vmatprep.subr.mxu0 0.0
      %344 = vmatpush2.msra.mxu0 0.0
      %345 = vmatprep.mubr.f32.mxu0 0.0
      %346 = vmatmul.mubr.f32.gmra.mxu0 %v249
      %v347 = vpop.f32.mrf.mxu0
      %v348 = vadd.f32 0.0, %v347
      %v349 = vpop.f32.mrf.mxu0
      %350 = vmatprep.mubr.f32.mxu0 0.0
      %351 = vmatmul.mubr.f32.gmra.mxu0 %v250
      %v352 = vpop.f32.mrf.mxu0
      %v353 = vadd.f32 0.0, %v352
      %v354 = vpop.f32.mrf.mxu0
      %355 = vmatprep.mubr.f32.mxu0 0.0
      %356 = vmatmul.mubr.f32.gmra.mxu0 %v251
      %v357 = vpop.f32.mrf.mxu0
      %v358 = vadd.f32 0.0, %v357
      %v359 = vpop.f32.mrf.mxu0
      %360 = vmatprep.mubr.f32.mxu0 0.0
      %361 = vmatmul.mubr.f32.gmra.mxu0 %v252
      %v362 = vpop.f32.mrf.mxu0
      %v363 = vadd.f32 0.0, %v362
      %v364 = vpop.f32.mrf.mxu0
      %365 = vmatprep.mubr.f32.mxu0 0.0
      %366 = vmatmul.mubr.f32.gmra.mxu0 %v253
      %v367 = vpop.f32.mrf.mxu0
      %v368 = vadd.f32 0.0, %v367
      %v369 = vpop.f32.mrf.mxu0
      %370 = vmatprep.mubr.f32.mxu0 0.0
      %371 = vmatmul.mubr.f32.gmra.mxu0 %v254
      %v372 = vpop.f32.mrf.mxu0
      %v373 = vadd.f32 0.0, %v372
      %v374 = vpop.f32.mrf.mxu0
      %375 = vmatprep.mubr.f32.mxu0 0.0
      %376 = vmatmul.mubr.f32.gmra.mxu0 %v255
      %v377 = vpop.f32.mrf.mxu0
      %v378 = vadd.f32 0.0, %v377
      %v379 = vpop.f32.mrf.mxu0
      %380 = vmatprep.mubr.f32.mxu0 0.0
      %381 = vmatmul.mubr.f32.gmra.mxu0 %v256
      %v382 = vpop.f32.mrf.mxu0
      %v383 = vadd.f32 0.0, %v382
      %v384 = vpop.f32.mrf.mxu0
      %385 = vmatprep.mubr.f32.mxu0 0.0
      %386 = vmatmul.mubr.f32.gmra.mxu0 %v257
      %v387 = vpop.f32.mrf.mxu0
      %v388 = vadd.f32 0.0, %v387
      %v389 = vpop.f32.mrf.mxu0
      %390 = vmatprep.mubr.f32.mxu0 0.0
      %391 = vmatmul.mubr.f32.gmra.mxu0 %v258
      %v392 = vpop.f32.mrf.mxu0
      %v393 = vadd.f32 0.0, %v392
      %v394 = vpop.f32.mrf.mxu0
      %395 = vmatprep.mubr.f32.mxu0 0.0
      %396 = vmatmul.mubr.f32.gmra.mxu0 %v259
      %v397 = vpop.f32.mrf.mxu0
      %v398 = vadd.f32 0.0, %v397
      %v399 = vpop.f32.mrf.mxu0
      %400 = vmatprep.mubr.f32.mxu0 0.0
      %401 = vmatmul.mubr.f32.gmra.mxu0 %v260
      %v402 = vpop.f32.mrf.mxu0
      %v403 = vadd.f32 0.0, %v402
      %v404 = vpop.f32.mrf.mxu0
      %405 = vmatprep.mubr.f32.mxu0 0.0
      %406 = vmatmul.mubr.f32.gmra.mxu0 %v261
      %v407 = vpop.f32.mrf.mxu0
      %v408 = vadd.f32 0.0, %v407
      %v409 = vpop.f32.mrf.mxu0
      %410 = vmatprep.mubr.f32.mxu0 0.0
      %411 = vmatmul.mubr.f32.gmra.mxu0 %v262
      %v412 = vpop.f32.mrf.mxu0
      %v413 = vadd.f32 0.0, %v412
      %v414 = vpop.f32.mrf.mxu0
      %415 = vmatprep.mubr.f32.mxu0 0.0
      %416 = vmatmul.mubr.f32.gmra.mxu0 %v263
      %v417 = vpop.f32.mrf.mxu0
      %v418 = vadd.f32 0.0, %v417
      %v419 = vpop.f32.mrf.mxu0
      %420 = vmatprep.mubr.f32.mxu0 0.0
      %421 = vmatmul.mubr.f32.gmra.mxu0 %v264
      %v422 = vpop.f32.mrf.mxu0
      %v423 = vadd.f32 0.0, %v422
      %v424 = vpop.f32.mrf.mxu0
      %425 = vdwg.mxu0
      %v426 = vld [vmem:[%s1] sm:$0xff]
      %v427 = vld [vmem:[%s1 + $0x8] sm:$0xff]
      %v428 = vld [vmem:[%s1 + $0x10] sm:$0xff]
      %v429 = vld [vmem:[%s1 + $0x18] sm:$0xff]
      %v430 = vld [vmem:[%s1 + $0x20] sm:$0xff]
      %v431 = vld [vmem:[%s1 + $0x28] sm:$0xff]
      %v432 = vld [vmem:[%s1 + $0x30] sm:$0xff]
      %v433 = vld [vmem:[%s1 + $0x38] sm:$0xff]
      %v434 = vld [vmem:[%s1 + $0x40] sm:$0xff]
      %v435 = vld [vmem:[%s1 + $0x48] sm:$0xff]
      %v436 = vld [vmem:[%s1 + $0x50] sm:$0xff]
      %v437 = vld [vmem:[%s1 + $0x58] sm:$0xff]
      %v438 = vld [vmem:[%s1 + $0x60] sm:$0xff]
      %v439 = vld [vmem:[%s1 + $0x68] sm:$0xff]
      %v440 = vld [vmem:[%s1 + $0x70] sm:$0xff]
      %v441 = vld [vmem:[%s1 + $0x78] sm:$0xff]
      %v442 = vld [vmem:[%s196] sm:$0x1]
      %v444 = vlaneseq
      %v445 = vshrl.u32 %v444, 7
      %v446 = vsub.s32 0, %v445
      %v447 = vrot.slane %v442, %v446
      %449 = vmatprep.subr.mxu0 0.0
      %450 = vmatpush1.msra.mxu0 %v423
      %451 = vmatprep.subr.mxu0 0.0
      %452 = vmatpush1.msra.mxu0 %v418
      %453 = vmatprep.subr.mxu0 0.0
      %454 = vmatpush1.msra.mxu0 %v413
      %455 = vmatprep.subr.mxu0 0.0
      %456 = vmatpush1.msra.mxu0 %v408
      %457 = vmatprep.subr.mxu0 0.0
      %458 = vmatpush1.msra.mxu0 %v403
      %459 = vmatprep.subr.mxu0 0.0
      %460 = vmatpush1.msra.mxu0 %v398
      %461 = vmatprep.subr.mxu0 0.0
      %462 = vmatpush1.msra.mxu0 %v393
      %463 = vmatprep.subr.mxu0 0.0
      %464 = vmatpush1.msra.mxu0 %v388
      %465 = vmatprep.subr.mxu0 0.0
      %466 = vmatpush1.msra.mxu0 %v383
      %467 = vmatprep.subr.mxu0 0.0
      %468 = vmatpush1.msra.mxu0 %v378
      %469 = vmatprep.subr.mxu0 0.0
      %470 = vmatpush1.msra.mxu0 %v373
      %471 = vmatprep.subr.mxu0 0.0
      %472 = vmatpush1.msra.mxu0 %v368
      %473 = vmatprep.subr.mxu0 0.0
      %474 = vmatpush1.msra.mxu0 %v363
      %475 = vmatprep.subr.mxu0 0.0
      %476 = vmatpush1.msra.mxu0 %v358
      %477 = vmatprep.subr.mxu0 0.0
      %478 = vmatpush1.msra.mxu0 %v353
      %479 = vmatprep.subr.mxu0 0.0
      %480 = vmatpush1.msra.mxu0 %v348
      %481 = vmatprep.subr.mxu0 0.0
      %482 = vmatpush2.msra.mxu0 0.0
      %483 = vmatprep.subr.mxu0 0.0
      %484 = vmatpush2.msra.mxu0 0.0
      %485 = vmatprep.subr.mxu0 0.0
      %486 = vmatpush2.msra.mxu0 0.0
      %487 = vmatprep.subr.mxu0 0.0
      %488 = vmatpush2.msra.mxu0 0.0
      %489 = vmatprep.subr.mxu0 0.0
      %490 = vmatpush2.msra.mxu0 0.0
      %491 = vmatprep.subr.mxu0 0.0
      %492 = vmatpush2.msra.mxu0 0.0
      %493 = vmatprep.subr.mxu0 0.0
      %494 = vmatpush2.msra.mxu0 0.0
      %495 = vmatprep.subr.mxu0 0.0
      %496 = vmatpush2.msra.mxu0 0.0
      %497 = vmatprep.subr.mxu0 0.0
      %498 = vmatpush2.msra.mxu0 0.0
      %499 = vmatprep.subr.mxu0 0.0
      %500 = vmatpush2.msra.mxu0 0.0
      %501 = vmatprep.subr.mxu0 0.0
      %502 = vmatpush2.msra.mxu0 0.0
      %503 = vmatprep.subr.mxu0 0.0
      %504 = vmatpush2.msra.mxu0 0.0
      %505 = vmatprep.subr.mxu0 0.0
      %506 = vmatpush2.msra.mxu0 0.0
      %507 = vmatprep.subr.mxu0 0.0
      %508 = vmatpush2.msra.mxu0 0.0
      %509 = vmatprep.subr.mxu0 0.0
      %510 = vmatpush2.msra.mxu0 0.0
      %511 = vmatprep.subr.mxu0 0.0
      %512 = vmatpush2.msra.mxu0 0.0
      %513 = vmatprep.mubr.f32.mxu0 0.0
      %514 = vmatmul.mubr.f32.gmra.mxu0 %v426
      %v515 = vpop.f32.mrf.mxu0
      %v516 = vadd.f32 %v447, %v515
      %v517 = vpop.f32.mrf.mxu0
      %518 = vmatprep.mubr.f32.mxu0 0.0
      %519 = vmatmul.mubr.f32.gmra.mxu0 %v427
      %v520 = vpop.f32.mrf.mxu0
      %v521 = vadd.f32 %v447, %v520
      %v522 = vpop.f32.mrf.mxu0
      %523 = vmatprep.mubr.f32.mxu0 0.0
      %524 = vmatmul.mubr.f32.gmra.mxu0 %v428
      %v525 = vpop.f32.mrf.mxu0
      %v526 = vadd.f32 %v447, %v525
      %v527 = vpop.f32.mrf.mxu0
      %528 = vmatprep.mubr.f32.mxu0 0.0
      %529 = vmatmul.mubr.f32.gmra.mxu0 %v429
      %v530 = vpop.f32.mrf.mxu0
      %v531 = vadd.f32 %v447, %v530
      %v532 = vpop.f32.mrf.mxu0
      %533 = vmatprep.mubr.f32.mxu0 0.0
      %534 = vmatmul.mubr.f32.gmra.mxu0 %v430
      %v535 = vpop.f32.mrf.mxu0
      %v536 = vadd.f32 %v447, %v535
      %v537 = vpop.f32.mrf.mxu0
      %538 = vmatprep.mubr.f32.mxu0 0.0
      %539 = vmatmul.mubr.f32.gmra.mxu0 %v431
      %v540 = vpop.f32.mrf.mxu0
      %v541 = vadd.f32 %v447, %v540
      %v542 = vpop.f32.mrf.mxu0
      %543 = vmatprep.mubr.f32.mxu0 0.0
      %544 = vmatmul.mubr.f32.gmra.mxu0 %v432
      %v545 = vpop.f32.mrf.mxu0
      %v546 = vadd.f32 %v447, %v545
      %v547 = vpop.f32.mrf.mxu0
      %548 = vmatprep.mubr.f32.mxu0 0.0
      %549 = vmatmul.mubr.f32.gmra.mxu0 %v433
      %v550 = vpop.f32.mrf.mxu0
      %v551 = vadd.f32 %v447, %v550
      %v552 = vpop.f32.mrf.mxu0
      %553 = vmatprep.mubr.f32.mxu0 0.0
      %554 = vmatmul.mubr.f32.gmra.mxu0 %v434
      %v555 = vpop.f32.mrf.mxu0
      %v556 = vadd.f32 %v447, %v555
      %v557 = vpop.f32.mrf.mxu0
      %558 = vmatprep.mubr.f32.mxu0 0.0
      %559 = vmatmul.mubr.f32.gmra.mxu0 %v435
      %v560 = vpop.f32.mrf.mxu0
      %v561 = vadd.f32 %v447, %v560
      %v562 = vpop.f32.mrf.mxu0
      %563 = vmatprep.mubr.f32.mxu0 0.0
      %564 = vmatmul.mubr.f32.gmra.mxu0 %v436
      %v565 = vpop.f32.mrf.mxu0
      %v566 = vadd.f32 %v447, %v565
      %v567 = vpop.f32.mrf.mxu0
      %568 = vmatprep.mubr.f32.mxu0 0.0
      %569 = vmatmul.mubr.f32.gmra.mxu0 %v437
      %v570 = vpop.f32.mrf.mxu0
      %v571 = vadd.f32 %v447, %v570
      %v572 = vpop.f32.mrf.mxu0
      %573 = vmatprep.mubr.f32.mxu0 0.0
      %574 = vmatmul.mubr.f32.gmra.mxu0 %v438
      %v575 = vpop.f32.mrf.mxu0
      %v576 = vadd.f32 %v447, %v575
      %v577 = vpop.f32.mrf.mxu0
      %578 = vmatprep.mubr.f32.mxu0 0.0
      %579 = vmatmul.mubr.f32.gmra.mxu0 %v439
      %v580 = vpop.f32.mrf.mxu0
      %v581 = vadd.f32 %v447, %v580
      %v582 = vpop.f32.mrf.mxu0
      %583 = vmatprep.mubr.f32.mxu0 0.0
      %584 = vmatmul.mubr.f32.gmra.mxu0 %v440
      %v585 = vpop.f32.mrf.mxu0
      %v586 = vadd.f32 %v447, %v585
      %v587 = vpop.f32.mrf.mxu0
      %588 = vmatprep.mubr.f32.mxu0 0.0
      %589 = vmatmul.mubr.f32.gmra.mxu0 %v441
      %v590 = vpop.f32.mrf.mxu0
      %v591 = vadd.f32 %v447, %v590
      %v592 = vpop.f32.mrf.mxu0
      %593 = vdwg.mxu0
      %v594 = vmax.f32 %v516, 0.0
      %v595 = vmax.f32 %v521, 0.0
      %v596 = vmax.f32 %v526, 0.0
      %v597 = vmax.f32 %v531, 0.0
      %v598 = vmax.f32 %v536, 0.0
      %v599 = vmax.f32 %v541, 0.0
      %v600 = vmax.f32 %v546, 0.0
      %v601 = vmax.f32 %v551, 0.0
      %v602 = vmax.f32 %v556, 0.0
      %v603 = vmax.f32 %v561, 0.0
      %v604 = vmax.f32 %v566, 0.0
      %v605 = vmax.f32 %v571, 0.0
      %v606 = vmax.f32 %v576, 0.0
      %v607 = vmax.f32 %v581, 0.0
      %v608 = vmax.f32 %v586, 0.0
      %v609 = vmax.f32 %v591, 0.0
      %p610 = scmp.lt.s32.totalorder %s15, 9
      // Predicated region
      $region41: #{dense_gcn_forward.1} parent=35 // pred_check
        %p611 = pneg %p610
      $region42: #{dense_gcn_forward.1} parent=35 // pred_check_branch
        %613 = sbr.rel (%p611) target = $region44
      $region43: #{dense_gcn_forward.1} parent=35 // pred_region
        %v614 = vld [vmem:[#allocation3] sm:$0xff]
        %v615 = vld [vmem:[#allocation3 + $0x8] sm:$0xff]
        %v616 = vld [vmem:[#allocation3 + $0x10] sm:$0xff]
        %v617 = vld [vmem:[#allocation3 + $0x18] sm:$0xff]
        %v618 = vld [vmem:[#allocation3 + $0x20] sm:$0xff]
        %v619 = vld [vmem:[#allocation3 + $0x28] sm:$0xff]
        %v620 = vld [vmem:[#allocation3 + $0x30] sm:$0xff]
        %v621 = vld [vmem:[#allocation3 + $0x38] sm:$0xff]
        %v622 = vld [vmem:[#allocation3 + $0x40] sm:$0xff]
        %v623 = vld [vmem:[#allocation3 + $0x48] sm:$0xff]
        %v624 = vld [vmem:[#allocation3 + $0x50] sm:$0xff]
        %v625 = vld [vmem:[#allocation3 + $0x58] sm:$0xff]
        %v626 = vld [vmem:[#allocation3 + $0x60] sm:$0xff]
        %v627 = vld [vmem:[#allocation3 + $0x68] sm:$0xff]
        %v628 = vld [vmem:[#allocation3 + $0x70] sm:$0xff]
        %v629 = vld [vmem:[#allocation3 + $0x78] sm:$0xff]
        %v630 = vadd.f32 %v594, %v614
        %v631 = vadd.f32 %v595, %v615
        %v632 = vadd.f32 %v596, %v616
        %v633 = vadd.f32 %v597, %v617
        %v634 = vadd.f32 %v598, %v618
        %v635 = vadd.f32 %v599, %v619
        %v636 = vadd.f32 %v600, %v620
        %v637 = vadd.f32 %v601, %v621
        %v638 = vadd.f32 %v602, %v622
        %v639 = vadd.f32 %v603, %v623
        %v640 = vadd.f32 %v604, %v624
        %v641 = vadd.f32 %v605, %v625
        %v642 = vadd.f32 %v606, %v626
        %v643 = vadd.f32 %v607, %v627
        %v644 = vadd.f32 %v608, %v628
        %v645 = vadd.f32 %v609, %v629
        %646 = vst [vmem:[#allocation2] sm:$0xff] %v630
        %647 = vst [vmem:[#allocation2 + $0x8] sm:$0xff] %v631
        %648 = vst [vmem:[#allocation2 + $0x10] sm:$0xff] %v632
        %649 = vst [vmem:[#allocation2 + $0x18] sm:$0xff] %v633
        %650 = vst [vmem:[#allocation2 + $0x20] sm:$0xff] %v634
        %651 = vst [vmem:[#allocation2 + $0x28] sm:$0xff] %v635
        %652 = vst [vmem:[#allocation2 + $0x30] sm:$0xff] %v636
        %653 = vst [vmem:[#allocation2 + $0x38] sm:$0xff] %v637
        %654 = vst [vmem:[#allocation2 + $0x40] sm:$0xff] %v638
        %655 = vst [vmem:[#allocation2 + $0x48] sm:$0xff] %v639
        %656 = vst [vmem:[#allocation2 + $0x50] sm:$0xff] %v640
        %657 = vst [vmem:[#allocation2 + $0x58] sm:$0xff] %v641
        %658 = vst [vmem:[#allocation2 + $0x60] sm:$0xff] %v642
        %659 = vst [vmem:[#allocation2 + $0x68] sm:$0xff] %v643
        %660 = vst [vmem:[#allocation2 + $0x70] sm:$0xff] %v644
        %661 = vst [vmem:[#allocation2 + $0x78] sm:$0xff] %v645
        %v662 = vadd.f32 %v614, %v630
        %v663 = vadd.f32 %v615, %v631
        %v664 = vadd.f32 %v616, %v632
        %v665 = vadd.f32 %v617, %v633
        %v666 = vadd.f32 %v618, %v634
        %v667 = vadd.f32 %v619, %v635
        %v668 = vadd.f32 %v620, %v636
        %v669 = vadd.f32 %v621, %v637
        %v670 = vadd.f32 %v622, %v638
        %v671 = vadd.f32 %v623, %v639
        %v672 = vadd.f32 %v624, %v640
        %v673 = vadd.f32 %v625, %v641
        %v674 = vadd.f32 %v626, %v642
        %v675 = vadd.f32 %v627, %v643
        %v676 = vadd.f32 %v628, %v644
        %v677 = vadd.f32 %v629, %v645
        %678 = vst [vmem:[#allocation3] sm:$0xff] %v662
        %679 = vst [vmem:[#allocation3 + $0x8] sm:$0xff] %v663
        %680 = vst [vmem:[#allocation3 + $0x10] sm:$0xff] %v664
        %681 = vst [vmem:[#allocation3 + $0x18] sm:$0xff] %v665
        %682 = vst [vmem:[#allocation3 + $0x20] sm:$0xff] %v666
        %683 = vst [vmem:[#allocation3 + $0x28] sm:$0xff] %v667
        %684 = vst [vmem:[#allocation3 + $0x30] sm:$0xff] %v668
        %685 = vst [vmem:[#allocation3 + $0x38] sm:$0xff] %v669
        %686 = vst [vmem:[#allocation3 + $0x40] sm:$0xff] %v670
        %687 = vst [vmem:[#allocation3 + $0x48] sm:$0xff] %v671
        %688 = vst [vmem:[#allocation3 + $0x50] sm:$0xff] %v672
        %689 = vst [vmem:[#allocation3 + $0x58] sm:$0xff] %v673
        %690 = vst [vmem:[#allocation3 + $0x60] sm:$0xff] %v674
        %691 = vst [vmem:[#allocation3 + $0x68] sm:$0xff] %v675
        %692 = vst [vmem:[#allocation3 + $0x70] sm:$0xff] %v676
        %693 = vst [vmem:[#allocation3 + $0x78] sm:$0xff] %v677
      $region44: #{dense_gcn_forward.1} parent=35 // pred_fallthru
        _
      %p694 = scmp.eq.s32.totalorder %s15, 9
      // Predicated region
      $region45: #{dense_gcn_forward.1} parent=35 // pred_check
        %p695 = pneg %p694
      $region46: #{dense_gcn_forward.1} parent=35 // pred_check_branch
        %697 = sbr.rel (%p695) target = $region48
      $region47: #{dense_gcn_forward.1} parent=35 // pred_region
        %v698 = vlaneseq
        %v699 = vand.u32 %v698, 127
        %vm700 = vcmp.lt.s32.totalorder %v699, 16
        %v701 = vsel %vm700, %v594, -1e+30
        %v702 = vsel %vm700, %v595, -1e+30
        %v703 = vsel %vm700, %v596, -1e+30
        %v704 = vsel %vm700, %v597, -1e+30
        %v705 = vsel %vm700, %v598, -1e+30
        %v706 = vsel %vm700, %v599, -1e+30
        %v707 = vsel %vm700, %v600, -1e+30
        %v708 = vsel %vm700, %v601, -1e+30
        %v709 = vsel %vm700, %v602, -1e+30
        %v710 = vsel %vm700, %v603, -1e+30
        %v711 = vsel %vm700, %v604, -1e+30
        %v712 = vsel %vm700, %v605, -1e+30
        %v713 = vsel %vm700, %v606, -1e+30
        %v714 = vsel %vm700, %v607, -1e+30
        %v715 = vsel %vm700, %v608, -1e+30
        %v716 = vsel %vm700, %v609, -1e+30
        %717 = vmax.xlane.f32.xlu0 %v701
        %v718 = vpop.xlane.xlu0 %717
        %719 = vmax.xlane.f32.xlu0 %v702
        %v720 = vpop.xlane.xlu0 %719
        %721 = vmax.xlane.f32.xlu0 %v703
        %v722 = vpop.xlane.xlu0 %721
        %723 = vmax.xlane.f32.xlu0 %v704
        %v724 = vpop.xlane.xlu0 %723
        %725 = vmax.xlane.f32.xlu0 %v705
        %v726 = vpop.xlane.xlu0 %725
        %727 = vmax.xlane.f32.xlu0 %v706
        %v728 = vpop.xlane.xlu0 %727
        %729 = vmax.xlane.f32.xlu0 %v707
        %v730 = vpop.xlane.xlu0 %729
        %731 = vmax.xlane.f32.xlu0 %v708
        %v732 = vpop.xlane.xlu0 %731
        %733 = vmax.xlane.f32.xlu0 %v709
        %v734 = vpop.xlane.xlu0 %733
        %735 = vmax.xlane.f32.xlu0 %v710
        %v736 = vpop.xlane.xlu0 %735
        %737 = vmax.xlane.f32.xlu0 %v711
        %v738 = vpop.xlane.xlu0 %737
        %739 = vmax.xlane.f32.xlu0 %v712
        %v740 = vpop.xlane.xlu0 %739
        %741 = vmax.xlane.f32.xlu0 %v713
        %v742 = vpop.xlane.xlu0 %741
        %743 = vmax.xlane.f32.xlu0 %v714
        %v744 = vpop.xlane.xlu0 %743
        %745 = vmax.xlane.f32.xlu0 %v715
        %v746 = vpop.xlane.xlu0 %745
        %747 = vmax.xlane.f32.xlu0 %v716
        %v748 = vpop.xlane.xlu0 %747
        %v749 = vsub.f32 %v701, %v718
        %v750 = vsub.f32 %v702, %v720
        %v751 = vsub.f32 %v703, %v722
        %v752 = vsub.f32 %v704, %v724
        %v753 = vsub.f32 %v705, %v726
        %v754 = vsub.f32 %v706, %v728
        %v755 = vsub.f32 %v707, %v730
        %v756 = vsub.f32 %v708, %v732
        %v757 = vsub.f32 %v709, %v734
        %v758 = vsub.f32 %v710, %v736
        %v759 = vsub.f32 %v711, %v738
        %v760 = vsub.f32 %v712, %v740
        %v761 = vsub.f32 %v713, %v742
        %v762 = vsub.f32 %v714, %v744
        %v763 = vsub.f32 %v715, %v746
        %v764 = vsub.f32 %v716, %v748
        %v765 = vmul.f32 %v749, 1.442695
        %v766 = vpow.pop %v765
        %v767 = vmul.f32 %v750, 1.442695
        %v768 = vpow.pop %v767
        %v769 = vmul.f32 %v751, 1.442695
        %v770 = vpow.pop %v769
        %v771 = vmul.f32 %v752, 1.442695
        %v772 = vpow.pop %v771
        %v773 = vmul.f32 %v753, 1.442695
        %v774 = vpow.pop %v773
        %v775 = vmul.f32 %v754, 1.442695
        %v776 = vpow.pop %v775
        %v777 = vmul.f32 %v755, 1.442695
        %v778 = vpow.pop %v777
        %v779 = vmul.f32 %v756, 1.442695
        %v780 = vpow.pop %v779
        %v781 = vmul.f32 %v757, 1.442695
        %v782 = vpow.pop %v781
        %v783 = vmul.f32 %v758, 1.442695
        %v784 = vpow.pop %v783
        %v785 = vmul.f32 %v759, 1.442695
        %v786 = vpow.pop %v785
        %v787 = vmul.f32 %v760, 1.442695
        %v788 = vpow.pop %v787
        %v789 = vmul.f32 %v761, 1.442695
        %v790 = vpow.pop %v789
        %v791 = vmul.f32 %v762, 1.442695
        %v792 = vpow.pop %v791
        %v793 = vmul.f32 %v763, 1.442695
        %v794 = vpow.pop %v793
        %v795 = vmul.f32 %v764, 1.442695
        %v796 = vpow.pop %v795
        %797 = vadd.xlane.f32.xlu0 %v766
        %v798 = vpop.xlane.xlu0 %797
        %799 = vadd.xlane.f32.xlu0 %v768
        %v800 = vpop.xlane.xlu0 %799
        %801 = vadd.xlane.f32.xlu0 %v770
        %v802 = vpop.xlane.xlu0 %801
        %803 = vadd.xlane.f32.xlu0 %v772
        %v804 = vpop.xlane.xlu0 %803
        %805 = vadd.xlane.f32.xlu0 %v774
        %v806 = vpop.xlane.xlu0 %805
        %807 = vadd.xlane.f32.xlu0 %v776
        %v808 = vpop.xlane.xlu0 %807
        %809 = vadd.xlane.f32.xlu0 %v778
        %v810 = vpop.xlane.xlu0 %809
        %811 = vadd.xlane.f32.xlu0 %v780
        %v812 = vpop.xlane.xlu0 %811
        %813 = vadd.xlane.f32.xlu0 %v782
        %v814 = vpop.xlane.xlu0 %813
        %815 = vadd.xlane.f32.xlu0 %v784
        %v816 = vpop.xlane.xlu0 %815
        %817 = vadd.xlane.f32.xlu0 %v786
        %v818 = vpop.xlane.xlu0 %817
        %819 = vadd.xlane.f32.xlu0 %v788
        %v820 = vpop.xlane.xlu0 %819
        %821 = vadd.xlane.f32.xlu0 %v790
        %v822 = vpop.xlane.xlu0 %821
        %823 = vadd.xlane.f32.xlu0 %v792
        %v824 = vpop.xlane.xlu0 %823
        %825 = vadd.xlane.f32.xlu0 %v794
        %v826 = vpop.xlane.xlu0 %825
        %827 = vadd.xlane.f32.xlu0 %v796
        %v828 = vpop.xlane.xlu0 %827
        %v829 = vlog2.pop %v798
        %v830 = vmul.f32 %v829, 0.6931472
        %v831 = vlog2.pop %v800
        %v832 = vmul.f32 %v831, 0.6931472
        %v833 = vlog2.pop %v802
        %v834 = vmul.f32 %v833, 0.6931472
        %v835 = vlog2.pop %v804
        %v836 = vmul.f32 %v835, 0.6931472
        %v837 = vlog2.pop %v806
        %v838 = vmul.f32 %v837, 0.6931472
        %v839 = vlog2.pop %v808
        %v840 = vmul.f32 %v839, 0.6931472
        %v841 = vlog2.pop %v810
        %v842 = vmul.f32 %v841, 0.6931472
        %v843 = vlog2.pop %v812
        %v844 = vmul.f32 %v843, 0.6931472
        %v845 = vlog2.pop %v814
        %v846 = vmul.f32 %v845, 0.6931472
        %v847 = vlog2.pop %v816
        %v848 = vmul.f32 %v847, 0.6931472
        %v849 = vlog2.pop %v818
        %v850 = vmul.f32 %v849, 0.6931472
        %v851 = vlog2.pop %v820
        %v852 = vmul.f32 %v851, 0.6931472
        %v853 = vlog2.pop %v822
        %v854 = vmul.f32 %v853, 0.6931472
        %v855 = vlog2.pop %v824
        %v856 = vmul.f32 %v855, 0.6931472
        %v857 = vlog2.pop %v826
        %v858 = vmul.f32 %v857, 0.6931472
        %v859 = vlog2.pop %v828
        %v860 = vmul.f32 %v859, 0.6931472
        %v861 = vsub.f32 %v749, %v830
        %v862 = vsub.f32 %v750, %v832
        %v863 = vsub.f32 %v751, %v834
        %v864 = vsub.f32 %v752, %v836
        %v865 = vsub.f32 %v753, %v838
        %v866 = vsub.f32 %v754, %v840
        %v867 = vsub.f32 %v755, %v842
        %v868 = vsub.f32 %v756, %v844
        %v869 = vsub.f32 %v757, %v846
        %v870 = vsub.f32 %v758, %v848
        %v871 = vsub.f32 %v759, %v850
        %v872 = vsub.f32 %v760, %v852
        %v873 = vsub.f32 %v761, %v854
        %v874 = vsub.f32 %v762, %v856
        %v875 = vsub.f32 %v763, %v858
        %v876 = vsub.f32 %v764, %v860
        %v877 = vsel %vm700, %v861, 0.0
        %v878 = vsel %vm700, %v862, 0.0
        %v879 = vsel %vm700, %v863, 0.0
        %v880 = vsel %vm700, %v864, 0.0
        %v881 = vsel %vm700, %v865, 0.0
        %v882 = vsel %vm700, %v866, 0.0
        %v883 = vsel %vm700, %v867, 0.0
        %v884 = vsel %vm700, %v868, 0.0
        %v885 = vsel %vm700, %v869, 0.0
        %v886 = vsel %vm700, %v870, 0.0
        %v887 = vsel %vm700, %v871, 0.0
        %v888 = vsel %vm700, %v872, 0.0
        %v889 = vsel %vm700, %v873, 0.0
        %v890 = vsel %vm700, %v874, 0.0
        %v891 = vsel %vm700, %v875, 0.0
        %v892 = vsel %vm700, %v876, 0.0
        %893 = vst [vmem:[%s4] sm:$0xff] %v877
        %894 = vst [vmem:[%s4 + $0x8] sm:$0xff] %v878
        %895 = vst [vmem:[%s4 + $0x10] sm:$0xff] %v879
        %896 = vst [vmem:[%s4 + $0x18] sm:$0xff] %v880
        %897 = vst [vmem:[%s4 + $0x20] sm:$0xff] %v881
        %898 = vst [vmem:[%s4 + $0x28] sm:$0xff] %v882
        %899 = vst [vmem:[%s4 + $0x30] sm:$0xff] %v883
        %900 = vst [vmem:[%s4 + $0x38] sm:$0xff] %v884
        %901 = vst [vmem:[%s4 + $0x40] sm:$0xff] %v885
        %902 = vst [vmem:[%s4 + $0x48] sm:$0xff] %v886
        %903 = vst [vmem:[%s4 + $0x50] sm:$0xff] %v887
        %904 = vst [vmem:[%s4 + $0x58] sm:$0xff] %v888
        %905 = vst [vmem:[%s4 + $0x60] sm:$0xff] %v889
        %906 = vst [vmem:[%s4 + $0x68] sm:$0xff] %v890
        %907 = vst [vmem:[%s4 + $0x70] sm:$0xff] %v891
        %908 = vst [vmem:[%s4 + $0x78] sm:$0xff] %v892
      $region48: #{dense_gcn_forward.1} parent=35 // pred_fallthru
        _
      // Predicated region
      $region49: #{dense_gcn_forward.1} parent=35 // pred_check
        %p909 = pneg %p122
      $region50: #{dense_gcn_forward.1} parent=35 // pred_check_branch
        %911 = sbr.rel (%p909) target = $region52
      $region51: #{dense_gcn_forward.1} parent=35 // pred_region
        _
      $region52: #{dense_gcn_forward.1} parent=35 // pred_fallthru
        _
      // Predicated region
      $region53: #{dense_gcn_forward.1} parent=35 // pred_check
        %p912 = pneg %p122
      $region54: #{dense_gcn_forward.1} parent=35 // pred_check_branch
        %914 = sbr.rel (%p912) target = $region56
      $region55: #{dense_gcn_forward.1} parent=35 // pred_region
        _
      $region56: #{dense_gcn_forward.1} parent=35 // pred_fallthru
        _
    $region36: #{dense_gcn_forward.1} parent=5 // pred_fallthru
      _
    %p915 = scmp.le.s32.totalorder 2, %s10
    // Predicated region
    $region57: #{dense_gcn_forward.1} parent=5 // pred_check
      %p916 = pneg %p915
    $region58: #{dense_gcn_forward.1} parent=5 // pred_check_branch
      %918 = sbr.rel (%p916) target = $region60
    $region59: #{dense_gcn_forward.1} parent=5 // pred_region
      %s919 = ssub.s32 %s10, 2
    $region60: #{dense_gcn_forward.1} parent=5 // pred_fallthru
      _
  $region6: #{dense_gcn_forward.1} parent=0 // loop_footer
    %s14 = sadd.s32 1, %s10
  $region7: #{dense_gcn_forward.1} parent=0 // loop_footer_branch
    %9 = sbr.rel target = $region3
  $region8: #{dense_gcn_forward.1} parent=0 // loop_exit
    _

</llo_original>
